<compile_context>
chip_gen: v6e
topology: v6e:2x2x1
jax: 0.10.0
libtpu: 0.0.40
codegen_flags: <defaults>
</compile_context>

<pallas_src>
import math
import numpy as np
import jax
import jax.numpy as jnp
from jax.experimental import pallas as pl
from jax.experimental.pallas import tpu as pltpu


def _round_up(a, b):
    return (a + b - 1) // b * b


def _build_taps(k, d, H, W, Cp):
    """Static flat lane-shifts + boundary masks for a kxk conv with dilation d."""
    p = d * (k - 1) // 2
    hh = np.arange(H * W) // W
    ww = np.arange(H * W) % W
    offs, masks = [], []
    for dh in range(k):
        for dw in range(k):
            oh, ow = dh * d - p, dw * d - p
            offs.append(oh * W + ow)
            valid = ((hh + oh >= 0) & (hh + oh < H) &
                     (ww + ow >= 0) & (ww + ow < W))
            masks.append(valid.astype(np.float32))
    # im2col row order is (tap-major, channel-minor) -> repeat each tap mask Cp times
    mask = np.repeat(np.stack(masks, axis=0), Cp, axis=0)       # (k*k*Cp, H*W)
    return offs, mask


# ----------------------------------------------------------------------------
# Fused forward
# ----------------------------------------------------------------------------
def context_block_forward(x_nchw, params, *, k, dil, stride=1):
    assert k % 2 == 1
    assert stride == 1, "stride > 1 not implemented"
    B, C, H, W = x_nchw.shape
    N = H * W                              # lanes; 256 here (multiple of 128 -> dense)
    Cp = _round_up(max(C, 8), 8)           # channels padded to a full sublane tile
    KKC = k * k * Cp                       # im2col contraction size
    WPK = max(KKC, 2 * Cp)                 # packed weight width

    # ---- wrapper-side parameter packing (exact, outside the kernel) ---------
    def prep_conv_w(p):
        w = jnp.pad(p["w"], ((0, 0), (0, 0), (0, Cp - C), (0, Cp - C)))   # (k,k,Cp,Cp)
        wt = w.reshape(k * k * Cp, Cp).T                                  # (Cp, k*k*Cp)
        return jnp.pad(wt, ((0, 0), (0, WPK - KKC)))

    wb = params["bottleneck"]["w"].reshape(4 * C, C)
    wf1 = jnp.pad(wb[:C], ((0, Cp - C), (0, Cp - C)))                     # d1 block
    wf2 = jnp.pad(wb[C:2 * C] + wb[2 * C:3 * C] + wb[3 * C:4 * C],        # 3x d2 folded
                  ((0, Cp - C), (0, Cp - C)))
    wt_bn = jnp.concatenate([wf1, wf2], axis=0).T                         # (Cp, 2Cp)
    wt_bn = jnp.pad(wt_bn, ((0, 0), (0, WPK - 2 * Cp)))

    # packed order: 0=_conv_in_, 1=_d_1_, 2=_d_2_, 3=_bottleneck_, 4=_conv_out_
    w_all = jnp.stack([prep_conv_w(params["conv_in"]),
                       prep_conv_w(params["d1"]),
                       prep_conv_w(params["d2"]),
                       wt_bn,
                       prep_conv_w(params["conv_out"])], axis=0).astype(jnp.float32)

    def prep_b(p):
        return jnp.pad(p["b"], (0, Cp - C))

    b_all = jnp.stack([prep_b(params["conv_in"]), prep_b(params["d1"]),
                       prep_b(params["d2"]), prep_b(params["bottleneck"]),
                       prep_b(params["conv_out"])], axis=1).astype(jnp.float32)  # (Cp,5)

    shifts1, mask1 = _build_taps(k, dil, H, W, Cp)          # conv_in / d1 / conv_out
    shifts2, mask2 = _build_taps(k, 2 * dil, H, W, Cp)      # d2
    mask_all = jnp.asarray(np.stack([mask1, mask2], axis=0))                # (2,KKC,N)

    x = jnp.pad(x_nchw.reshape(B, C, N), ((0, 0), (0, Cp - C), (0, 0)))     # (B,Cp,N)

    # ---- the single fused kernel ---------------------------------------------
    def kernel(x_ref, w_ref, b_ref, m_ref, o_ref):
        xv = x_ref[0].astype(jnp.float32)                   # (Cp, N): lanes = N

        def shift_flat(a, off):
            # s[:, n] == a[:, n + off] wherever 0 <= n + off < N (wrap gets masked).
            o = off % N
            if o == 0:
                return a
            return jnp.concatenate([a[:, o:], a[:, :o]], axis=1)

        def conv(act, idx, shifts, m_idx, relu=False):
            # im2col: k*k lane shifts -> (k*k*Cp, N) patches -> ONE matmul.
            patches = jnp.concatenate([shift_flat(act, o) for o in shifts], axis=0)
            patches = patches * m_ref[m_idx]                 # zero the halo taps
            acc = jnp.dot(w_ref[idx][:, :KKC], patches,
                          preferred_element_type=jnp.float32)
            acc = acc + b_ref[:, idx:idx + 1]
            return jnp.maximum(acc, 0.0) if relu else acc

        h = conv(xv, 0, shifts1, 0, relu=True)               # _conv_in_ (+ReLU); skip = h
        d1 = conv(h, 1, shifts1, 0)                          # _d_1_
        d2 = conv(h, 2, shifts2, 1)                          # _d_2_ (used 3x in the cat)
        cat = jnp.concatenate([d1, d2], axis=0)              # (2Cp, N)
        bn = (jnp.dot(w_ref[3][:, :2 * Cp], cat,             # folded 1x1 bottleneck
                      preferred_element_type=jnp.float32)
              + b_ref[:, 3:4])
        h2 = h + bn                                          # skip_connection + bottleneck
        out = conv(h2, 4, shifts1, 0)                        # _conv_out_
        o_ref[0] = (xv + out).astype(o_ref.dtype)            # + input skip

    out = pl.pallas_call(
        kernel,
        out_shape=jax.ShapeDtypeStruct((B, Cp, N), x.dtype),
        grid=(B,),
        in_specs=[pl.BlockSpec((1, Cp, N), lambda i: (i, 0, 0)),
                  pl.BlockSpec((5, Cp, WPK), lambda i: (0, 0, 0)),
                  pl.BlockSpec((Cp, 5), lambda i: (0, 0)),
                  pl.BlockSpec((2, KKC, N), lambda i: (0, 0, 0))],
        out_specs=pl.BlockSpec((1, Cp, N), lambda i: (i, 0, 0)),
        compiler_params=pltpu.CompilerParams(
            dimension_semantics=("parallel",)),               # v7x: 2 TCs split the batch
    )(x, w_all, b_all, mask_all)

    return out[:, :C, :].reshape(B, C, H, W)


# ----------------------------------------------------------------------------
# Parameter init (xavier-uniform weights; small random biases to exercise bias path)
# ----------------------------------------------------------------------------
def xavier_uniform(key, ks, cin, cout):
    fan_in, fan_out = cin * ks * ks, cout * ks * ks
    bound = math.sqrt(6.0 / (fan_in + fan_out))
    return jax.random.uniform(key, (ks, ks, cin, cout), jnp.float32, -bound, bound)


def init_params(key, c, k):
    keys = iter(jax.random.split(key, 16))

    def conv_p(cin, cout, ks):
        return {"w": xavier_uniform(next(keys), ks, cin, cout),
                "b": 0.1 * jax.random.normal(next(keys), (cout,), jnp.float32)}

    return {
        "conv_in": conv_p(c, c, k),
        "conv_out": conv_p(c, c, k),
        "d1": conv_p(c, c, k),
        "d2": conv_p(c, c, k),
        "d3": conv_p(c, c, k),   # created in __init__ but never used in forward
        "d4": conv_p(c, c, k),   # created in __init__ but never used in forward
        "bottleneck": conv_p(4 * c, c, 1),
    }


# ----------------------------------------------------------------------------
# Pure-JAX reference (for correctness check)
# ----------------------------------------------------------------------------
def _conv_ref(x_nhwc, w_hwio, b, d):
    kk = w_hwio.shape[0]
    p = d * (kk - 1) // 2
    y = jax.lax.conv_general_dilated(
        x_nhwc, w_hwio, window_strides=(1, 1), padding=[(p, p), (p, p)],
        rhs_dilation=(d, d), dimension_numbers=("NHWC", "HWIO", "NHWC"),
        precision=jax.lax.Precision.HIGHEST)
    return y + b.reshape(1, 1, 1, -1)


def context_block_ref(x_nchw, params, *, k, dil):
    x = jnp.transpose(x_nchw, (0, 2, 3, 1))
    h = jax.nn.relu(_conv_ref(x, params["conv_in"]["w"], params["conv_in"]["b"], dil))
    d1 = _conv_ref(h, params["d1"]["w"], params["d1"]["b"], dil)
    d2 = _conv_ref(h, params["d2"]["w"], params["d2"]["b"], 2 * dil)
    cat = jnp.concatenate([d1, d2, d2, d2], axis=-1)
    bn = _conv_ref(cat, params["bottleneck"]["w"], params["bottleneck"]["b"], dil)
    out = h + bn
    out = _conv_ref(out, params["conv_out"]["w"], params["conv_out"]["b"], dil)
    out = x + out
    return jnp.transpose(out, (0, 3, 1, 2))


if __name__ == "__main__":
    key = jax.random.PRNGKey(0)
    k_x, k_p = jax.random.split(key)

    # _context_block_(in_channels=4, kernel_size=3, stride=1, dilation=1, bias=True)
    B, C, H, W = 2, 4, 16, 16
    ksize, dil = 3, 1

    x = jax.random.normal(k_x, (B, C, H, W), jnp.float32)
    params = init_params(k_p, C, ksize)

    y = context_block_forward(x, params, k=ksize, dil=dil)
    jax.block_until_ready(y)

    assert y.shape == (B, C, H, W), y.shape
    assert bool(jnp.all(jnp.isfinite(y)))

    # Correctness vs pure-JAX reference (tightened tolerance: f32 MXU accumulation).
    y_ref = context_block_ref(x, params, k=ksize, dil=dil)
    max_err = float(jnp.max(jnp.abs(y - y_ref)))
    assert jnp.allclose(y, y_ref, atol=2e-4, rtol=2e-4), max_err

    print("KERNEL_OK")
</pallas_src>

<mosaic_0001>
module attributes {stable_mosaic.version = 11 : i64} {
  func.func @kernel(%arg0: i32, %arg1: memref<1x8x256xf32, #tpu.memory_space<vmem>>, %arg2: memref<5x8x72xf32, #tpu.memory_space<vmem>>, %arg3: memref<8x5xf32, #tpu.memory_space<vmem>>, %arg4: memref<2x72x256xf32, #tpu.memory_space<vmem>>, %arg5: memref<1x8x256xf32, #tpu.memory_space<vmem>>) attributes {dimension_semantics = [#tpu.dimension_semantics<parallel>], iteration_bounds = array<i64: 2>, scalar_prefetch = 0 : i64, scratch_operands = 0 : i64, tpu.core_type = #tpu.core_type<tc>, window_params = [{transform_indices = @transform_0, window_bounds = array<i64: 1, 8, 256>}, {pipeline_mode = #tpu.pipeline_mode<synchronous>, transform_indices = @transform_1, window_bounds = array<i64: 5, 8, 72>}, {pipeline_mode = #tpu.pipeline_mode<synchronous>, transform_indices = @transform_2, window_bounds = array<i64: 8, 5>}, {pipeline_mode = #tpu.pipeline_mode<synchronous>, transform_indices = @transform_3, window_bounds = array<i64: 2, 72, 256>}, {transform_indices = @transform_4, window_bounds = array<i64: 1, 8, 256>}]} {
    %c0 = arith.constant 0 : index
    %c0_0 = arith.constant 0 : index
    %c0_1 = arith.constant 0 : index
    %0 = vector.load %arg1[%c0, %c0_0, %c0_1] : memref<1x8x256xf32, #tpu.memory_space<vmem>>, vector<1x8x256xf32>
    %1 = vector.shape_cast %0 : vector<1x8x256xf32> to vector<8x256xf32>
    %2 = vector.extract_strided_slice %1 {offsets = [0, 239], sizes = [8, 17], strides = [1, 1]} : vector<8x256xf32> to vector<8x17xf32>
    %3 = vector.extract_strided_slice %1 {offsets = [0, 0], sizes = [8, 239], strides = [1, 1]} : vector<8x256xf32> to vector<8x239xf32>
    %4 = tpu.concatenate %2, %3 in 1 : vector<8x17xf32>, vector<8x239xf32> -> vector<8x256xf32>
    %5 = vector.extract_strided_slice %1 {offsets = [0, 240], sizes = [8, 16], strides = [1, 1]} : vector<8x256xf32> to vector<8x16xf32>
    %6 = vector.extract_strided_slice %1 {offsets = [0, 0], sizes = [8, 240], strides = [1, 1]} : vector<8x256xf32> to vector<8x240xf32>
    %7 = tpu.concatenate %5, %6 in 1 : vector<8x16xf32>, vector<8x240xf32> -> vector<8x256xf32>
    %8 = vector.extract_strided_slice %1 {offsets = [0, 241], sizes = [8, 15], strides = [1, 1]} : vector<8x256xf32> to vector<8x15xf32>
    %9 = vector.extract_strided_slice %1 {offsets = [0, 0], sizes = [8, 241], strides = [1, 1]} : vector<8x256xf32> to vector<8x241xf32>
    %10 = tpu.concatenate %8, %9 in 1 : vector<8x15xf32>, vector<8x241xf32> -> vector<8x256xf32>
    %11 = vector.extract_strided_slice %1 {offsets = [0, 255], sizes = [8, 1], strides = [1, 1]} : vector<8x256xf32> to vector<8x1xf32>
    %12 = vector.extract_strided_slice %1 {offsets = [0, 0], sizes = [8, 255], strides = [1, 1]} : vector<8x256xf32> to vector<8x255xf32>
    %13 = tpu.concatenate %11, %12 in 1 : vector<8x1xf32>, vector<8x255xf32> -> vector<8x256xf32>
    %14 = vector.extract_strided_slice %1 {offsets = [0, 1], sizes = [8, 255], strides = [1, 1]} : vector<8x256xf32> to vector<8x255xf32>
    %15 = vector.extract_strided_slice %1 {offsets = [0, 0], sizes = [8, 1], strides = [1, 1]} : vector<8x256xf32> to vector<8x1xf32>
    %16 = tpu.concatenate %14, %15 in 1 : vector<8x255xf32>, vector<8x1xf32> -> vector<8x256xf32>
    %17 = vector.extract_strided_slice %1 {offsets = [0, 15], sizes = [8, 241], strides = [1, 1]} : vector<8x256xf32> to vector<8x241xf32>
    %18 = vector.extract_strided_slice %1 {offsets = [0, 0], sizes = [8, 15], strides = [1, 1]} : vector<8x256xf32> to vector<8x15xf32>
    %19 = tpu.concatenate %17, %18 in 1 : vector<8x241xf32>, vector<8x15xf32> -> vector<8x256xf32>
    %20 = vector.extract_strided_slice %1 {offsets = [0, 16], sizes = [8, 240], strides = [1, 1]} : vector<8x256xf32> to vector<8x240xf32>
    %21 = vector.extract_strided_slice %1 {offsets = [0, 0], sizes = [8, 16], strides = [1, 1]} : vector<8x256xf32> to vector<8x16xf32>
    %22 = tpu.concatenate %20, %21 in 1 : vector<8x240xf32>, vector<8x16xf32> -> vector<8x256xf32>
    %23 = vector.extract_strided_slice %1 {offsets = [0, 17], sizes = [8, 239], strides = [1, 1]} : vector<8x256xf32> to vector<8x239xf32>
    %24 = vector.extract_strided_slice %1 {offsets = [0, 0], sizes = [8, 17], strides = [1, 1]} : vector<8x256xf32> to vector<8x17xf32>
    %25 = tpu.concatenate %23, %24 in 1 : vector<8x239xf32>, vector<8x17xf32> -> vector<8x256xf32>
    %26 = tpu.concatenate %4, %7, %10, %13, %1, %16, %19, %22, %25 in 0 : vector<8x256xf32>, vector<8x256xf32>, vector<8x256xf32>, vector<8x256xf32>, vector<8x256xf32>, vector<8x256xf32>, vector<8x256xf32>, vector<8x256xf32>, vector<8x256xf32> -> vector<72x256xf32>
    %c0_2 = arith.constant 0 : index
    %c0_3 = arith.constant 0 : index
    %c0_4 = arith.constant 0 : index
    %27 = vector.load %arg4[%c0_2, %c0_3, %c0_4] : memref<2x72x256xf32, #tpu.memory_space<vmem>>, vector<1x72x256xf32>
    %28 = vector.shape_cast %27 : vector<1x72x256xf32> to vector<72x256xf32>
    %29 = arith.mulf %26, %28 : vector<72x256xf32>
    %c0_5 = arith.constant 0 : index
    %c0_6 = arith.constant 0 : index
    %c0_7 = arith.constant 0 : index
    %30 = vector.load %arg2[%c0_5, %c0_6, %c0_7] : memref<5x8x72xf32, #tpu.memory_space<vmem>>, vector<1x8x72xf32>
    %31 = vector.shape_cast %30 : vector<1x8x72xf32> to vector<8x72xf32>
    %cst = arith.constant dense<0.000000e+00> : vector<8x256xf32>
    %32 = tpu.matmul %31, %29, %cst {dimension_numbers = #tpu.dot_dimension_numbers<[1], [0], [0], [1], [0, 0, 1, 1], [], []>} : vector<8x72xf32>, vector<72x256xf32>, vector<8x256xf32> -> vector<8x256xf32>
    %c0_8 = arith.constant 0 : index
    %c0_9 = arith.constant 0 : index
    %33 = vector.load %arg3[%c0_8, %c0_9] : memref<8x5xf32, #tpu.memory_space<vmem>>, vector<8x1xf32>
    %34 = vector.broadcast %33 : vector<8x1xf32> to vector<8x256xf32>
    %35 = arith.addf %32, %34 : vector<8x256xf32>
    %cst_10 = arith.constant 0.000000e+00 : f32
    %36 = vector.broadcast %cst_10 : f32 to vector<8x256xf32>
    %37 = arith.maximumf %35, %36 : vector<8x256xf32>
    %38 = vector.extract_strided_slice %37 {offsets = [0, 239], sizes = [8, 17], strides = [1, 1]} : vector<8x256xf32> to vector<8x17xf32>
    %39 = vector.extract_strided_slice %37 {offsets = [0, 0], sizes = [8, 239], strides = [1, 1]} : vector<8x256xf32> to vector<8x239xf32>
    %40 = tpu.concatenate %38, %39 in 1 : vector<8x17xf32>, vector<8x239xf32> -> vector<8x256xf32>
    %41 = vector.extract_strided_slice %37 {offsets = [0, 240], sizes = [8, 16], strides = [1, 1]} : vector<8x256xf32> to vector<8x16xf32>
    %42 = vector.extract_strided_slice %37 {offsets = [0, 0], sizes = [8, 240], strides = [1, 1]} : vector<8x256xf32> to vector<8x240xf32>
    %43 = tpu.concatenate %41, %42 in 1 : vector<8x16xf32>, vector<8x240xf32> -> vector<8x256xf32>
    %44 = vector.extract_strided_slice %37 {offsets = [0, 241], sizes = [8, 15], strides = [1, 1]} : vector<8x256xf32> to vector<8x15xf32>
    %45 = vector.extract_strided_slice %37 {offsets = [0, 0], sizes = [8, 241], strides = [1, 1]} : vector<8x256xf32> to vector<8x241xf32>
    %46 = tpu.concatenate %44, %45 in 1 : vector<8x15xf32>, vector<8x241xf32> -> vector<8x256xf32>
    %47 = vector.extract_strided_slice %37 {offsets = [0, 255], sizes = [8, 1], strides = [1, 1]} : vector<8x256xf32> to vector<8x1xf32>
    %48 = vector.extract_strided_slice %37 {offsets = [0, 0], sizes = [8, 255], strides = [1, 1]} : vector<8x256xf32> to vector<8x255xf32>
    %49 = tpu.concatenate %47, %48 in 1 : vector<8x1xf32>, vector<8x255xf32> -> vector<8x256xf32>
    %50 = vector.extract_strided_slice %37 {offsets = [0, 1], sizes = [8, 255], strides = [1, 1]} : vector<8x256xf32> to vector<8x255xf32>
    %51 = vector.extract_strided_slice %37 {offsets = [0, 0], sizes = [8, 1], strides = [1, 1]} : vector<8x256xf32> to vector<8x1xf32>
    %52 = tpu.concatenate %50, %51 in 1 : vector<8x255xf32>, vector<8x1xf32> -> vector<8x256xf32>
    %53 = vector.extract_strided_slice %37 {offsets = [0, 15], sizes = [8, 241], strides = [1, 1]} : vector<8x256xf32> to vector<8x241xf32>
    %54 = vector.extract_strided_slice %37 {offsets = [0, 0], sizes = [8, 15], strides = [1, 1]} : vector<8x256xf32> to vector<8x15xf32>
    %55 = tpu.concatenate %53, %54 in 1 : vector<8x241xf32>, vector<8x15xf32> -> vector<8x256xf32>
    %56 = vector.extract_strided_slice %37 {offsets = [0, 16], sizes = [8, 240], strides = [1, 1]} : vector<8x256xf32> to vector<8x240xf32>
    %57 = vector.extract_strided_slice %37 {offsets = [0, 0], sizes = [8, 16], strides = [1, 1]} : vector<8x256xf32> to vector<8x16xf32>
    %58 = tpu.concatenate %56, %57 in 1 : vector<8x240xf32>, vector<8x16xf32> -> vector<8x256xf32>
    %59 = vector.extract_strided_slice %37 {offsets = [0, 17], sizes = [8, 239], strides = [1, 1]} : vector<8x256xf32> to vector<8x239xf32>
    %60 = vector.extract_strided_slice %37 {offsets = [0, 0], sizes = [8, 17], strides = [1, 1]} : vector<8x256xf32> to vector<8x17xf32>
    %61 = tpu.concatenate %59, %60 in 1 : vector<8x239xf32>, vector<8x17xf32> -> vector<8x256xf32>
    %62 = tpu.concatenate %40, %43, %46, %49, %37, %52, %55, %58, %61 in 0 : vector<8x256xf32>, vector<8x256xf32>, vector<8x256xf32>, vector<8x256xf32>, vector<8x256xf32>, vector<8x256xf32>, vector<8x256xf32>, vector<8x256xf32>, vector<8x256xf32> -> vector<72x256xf32>
    %c0_11 = arith.constant 0 : index
    %c0_12 = arith.constant 0 : index
    %c0_13 = arith.constant 0 : index
    %63 = vector.load %arg4[%c0_11, %c0_12, %c0_13] : memref<2x72x256xf32, #tpu.memory_space<vmem>>, vector<1x72x256xf32>
    %64 = vector.shape_cast %63 : vector<1x72x256xf32> to vector<72x256xf32>
    %65 = arith.mulf %62, %64 : vector<72x256xf32>
    %c1 = arith.constant 1 : index
    %c0_14 = arith.constant 0 : index
    %c0_15 = arith.constant 0 : index
    %66 = vector.load %arg2[%c1, %c0_14, %c0_15] : memref<5x8x72xf32, #tpu.memory_space<vmem>>, vector<1x8x72xf32>
    %67 = vector.shape_cast %66 : vector<1x8x72xf32> to vector<8x72xf32>
    %cst_16 = arith.constant dense<0.000000e+00> : vector<8x256xf32>
    %68 = tpu.matmul %67, %65, %cst_16 {dimension_numbers = #tpu.dot_dimension_numbers<[1], [0], [0], [1], [0, 0, 1, 1], [], []>} : vector<8x72xf32>, vector<72x256xf32>, vector<8x256xf32> -> vector<8x256xf32>
    %c0_17 = arith.constant 0 : index
    %c1_18 = arith.constant 1 : index
    %69 = vector.load %arg3[%c0_17, %c1_18] : memref<8x5xf32, #tpu.memory_space<vmem>>, vector<8x1xf32>
    %70 = vector.broadcast %69 : vector<8x1xf32> to vector<8x256xf32>
    %71 = arith.addf %68, %70 : vector<8x256xf32>
    %72 = vector.extract_strided_slice %37 {offsets = [0, 222], sizes = [8, 34], strides = [1, 1]} : vector<8x256xf32> to vector<8x34xf32>
    %73 = vector.extract_strided_slice %37 {offsets = [0, 0], sizes = [8, 222], strides = [1, 1]} : vector<8x256xf32> to vector<8x222xf32>
    %74 = tpu.concatenate %72, %73 in 1 : vector<8x34xf32>, vector<8x222xf32> -> vector<8x256xf32>
    %75 = vector.extract_strided_slice %37 {offsets = [0, 224], sizes = [8, 32], strides = [1, 1]} : vector<8x256xf32> to vector<8x32xf32>
    %76 = vector.extract_strided_slice %37 {offsets = [0, 0], sizes = [8, 224], strides = [1, 1]} : vector<8x256xf32> to vector<8x224xf32>
    %77 = tpu.concatenate %75, %76 in 1 : vector<8x32xf32>, vector<8x224xf32> -> vector<8x256xf32>
    %78 = vector.extract_strided_slice %37 {offsets = [0, 226], sizes = [8, 30], strides = [1, 1]} : vector<8x256xf32> to vector<8x30xf32>
    %79 = vector.extract_strided_slice %37 {offsets = [0, 0], sizes = [8, 226], strides = [1, 1]} : vector<8x256xf32> to vector<8x226xf32>
    %80 = tpu.concatenate %78, %79 in 1 : vector<8x30xf32>, vector<8x226xf32> -> vector<8x256xf32>
    %81 = vector.extract_strided_slice %37 {offsets = [0, 254], sizes = [8, 2], strides = [1, 1]} : vector<8x256xf32> to vector<8x2xf32>
    %82 = vector.extract_strided_slice %37 {offsets = [0, 0], sizes = [8, 254], strides = [1, 1]} : vector<8x256xf32> to vector<8x254xf32>
    %83 = tpu.concatenate %81, %82 in 1 : vector<8x2xf32>, vector<8x254xf32> -> vector<8x256xf32>
    %84 = vector.extract_strided_slice %37 {offsets = [0, 2], sizes = [8, 254], strides = [1, 1]} : vector<8x256xf32> to vector<8x254xf32>
    %85 = vector.extract_strided_slice %37 {offsets = [0, 0], sizes = [8, 2], strides = [1, 1]} : vector<8x256xf32> to vector<8x2xf32>
    %86 = tpu.concatenate %84, %85 in 1 : vector<8x254xf32>, vector<8x2xf32> -> vector<8x256xf32>
    %87 = vector.extract_strided_slice %37 {offsets = [0, 30], sizes = [8, 226], strides = [1, 1]} : vector<8x256xf32> to vector<8x226xf32>
    %88 = vector.extract_strided_slice %37 {offsets = [0, 0], sizes = [8, 30], strides = [1, 1]} : vector<8x256xf32> to vector<8x30xf32>
    %89 = tpu.concatenate %87, %88 in 1 : vector<8x226xf32>, vector<8x30xf32> -> vector<8x256xf32>
    %90 = vector.extract_strided_slice %37 {offsets = [0, 32], sizes = [8, 224], strides = [1, 1]} : vector<8x256xf32> to vector<8x224xf32>
    %91 = vector.extract_strided_slice %37 {offsets = [0, 0], sizes = [8, 32], strides = [1, 1]} : vector<8x256xf32> to vector<8x32xf32>
    %92 = tpu.concatenate %90, %91 in 1 : vector<8x224xf32>, vector<8x32xf32> -> vector<8x256xf32>
    %93 = vector.extract_strided_slice %37 {offsets = [0, 34], sizes = [8, 222], strides = [1, 1]} : vector<8x256xf32> to vector<8x222xf32>
    %94 = vector.extract_strided_slice %37 {offsets = [0, 0], sizes = [8, 34], strides = [1, 1]} : vector<8x256xf32> to vector<8x34xf32>
    %95 = tpu.concatenate %93, %94 in 1 : vector<8x222xf32>, vector<8x34xf32> -> vector<8x256xf32>
    %96 = tpu.concatenate %74, %77, %80, %83, %37, %86, %89, %92, %95 in 0 : vector<8x256xf32>, vector<8x256xf32>, vector<8x256xf32>, vector<8x256xf32>, vector<8x256xf32>, vector<8x256xf32>, vector<8x256xf32>, vector<8x256xf32>, vector<8x256xf32> -> vector<72x256xf32>
    %c1_19 = arith.constant 1 : index
    %c0_20 = arith.constant 0 : index
    %c0_21 = arith.constant 0 : index
    %97 = vector.load %arg4[%c1_19, %c0_20, %c0_21] : memref<2x72x256xf32, #tpu.memory_space<vmem>>, vector<1x72x256xf32>
    %98 = vector.shape_cast %97 : vector<1x72x256xf32> to vector<72x256xf32>
    %99 = arith.mulf %96, %98 : vector<72x256xf32>
    %c2 = arith.constant 2 : index
    %c0_22 = arith.constant 0 : index
    %c0_23 = arith.constant 0 : index
    %100 = vector.load %arg2[%c2, %c0_22, %c0_23] : memref<5x8x72xf32, #tpu.memory_space<vmem>>, vector<1x8x72xf32>
    %101 = vector.shape_cast %100 : vector<1x8x72xf32> to vector<8x72xf32>
    %cst_24 = arith.constant dense<0.000000e+00> : vector<8x256xf32>
    %102 = tpu.matmul %101, %99, %cst_24 {dimension_numbers = #tpu.dot_dimension_numbers<[1], [0], [0], [1], [0, 0, 1, 1], [], []>} : vector<8x72xf32>, vector<72x256xf32>, vector<8x256xf32> -> vector<8x256xf32>
    %c0_25 = arith.constant 0 : index
    %c2_26 = arith.constant 2 : index
    %103 = vector.load %arg3[%c0_25, %c2_26] : memref<8x5xf32, #tpu.memory_space<vmem>>, vector<8x1xf32>
    %104 = vector.broadcast %103 : vector<8x1xf32> to vector<8x256xf32>
    %105 = arith.addf %102, %104 : vector<8x256xf32>
    %106 = tpu.concatenate %71, %105 in 0 : vector<8x256xf32>, vector<8x256xf32> -> vector<16x256xf32>
    %c3 = arith.constant 3 : index
    %c0_27 = arith.constant 0 : index
    %c0_28 = arith.constant 0 : index
    %107 = vector.load %arg2[%c3, %c0_27, %c0_28] : memref<5x8x72xf32, #tpu.memory_space<vmem>>, vector<1x8x72xf32>
    %108 = vector.shape_cast %107 : vector<1x8x72xf32> to vector<8x72xf32>
    %109 = vector.extract_strided_slice %108 {offsets = [0, 0], sizes = [8, 16], strides = [1, 1]} : vector<8x72xf32> to vector<8x16xf32>
    %cst_29 = arith.constant dense<0.000000e+00> : vector<8x256xf32>
    %110 = tpu.matmul %109, %106, %cst_29 {dimension_numbers = #tpu.dot_dimension_numbers<[1], [0], [0], [1], [0, 0, 1, 1], [], []>} : vector<8x16xf32>, vector<16x256xf32>, vector<8x256xf32> -> vector<8x256xf32>
    %c0_30 = arith.constant 0 : index
    %c3_31 = arith.constant 3 : index
    %111 = vector.load %arg3[%c0_30, %c3_31] : memref<8x5xf32, #tpu.memory_space<vmem>>, vector<8x1xf32>
    %112 = vector.broadcast %111 : vector<8x1xf32> to vector<8x256xf32>
    %113 = arith.addf %110, %112 : vector<8x256xf32>
    %114 = arith.addf %37, %113 : vector<8x256xf32>
    %115 = vector.extract_strided_slice %114 {offsets = [0, 239], sizes = [8, 17], strides = [1, 1]} : vector<8x256xf32> to vector<8x17xf32>
    %116 = vector.extract_strided_slice %114 {offsets = [0, 0], sizes = [8, 239], strides = [1, 1]} : vector<8x256xf32> to vector<8x239xf32>
    %117 = tpu.concatenate %115, %116 in 1 : vector<8x17xf32>, vector<8x239xf32> -> vector<8x256xf32>
    %118 = vector.extract_strided_slice %114 {offsets = [0, 240], sizes = [8, 16], strides = [1, 1]} : vector<8x256xf32> to vector<8x16xf32>
    %119 = vector.extract_strided_slice %114 {offsets = [0, 0], sizes = [8, 240], strides = [1, 1]} : vector<8x256xf32> to vector<8x240xf32>
    %120 = tpu.concatenate %118, %119 in 1 : vector<8x16xf32>, vector<8x240xf32> -> vector<8x256xf32>
    %121 = vector.extract_strided_slice %114 {offsets = [0, 241], sizes = [8, 15], strides = [1, 1]} : vector<8x256xf32> to vector<8x15xf32>
    %122 = vector.extract_strided_slice %114 {offsets = [0, 0], sizes = [8, 241], strides = [1, 1]} : vector<8x256xf32> to vector<8x241xf32>
    %123 = tpu.concatenate %121, %122 in 1 : vector<8x15xf32>, vector<8x241xf32> -> vector<8x256xf32>
    %124 = vector.extract_strided_slice %114 {offsets = [0, 255], sizes = [8, 1], strides = [1, 1]} : vector<8x256xf32> to vector<8x1xf32>
    %125 = vector.extract_strided_slice %114 {offsets = [0, 0], sizes = [8, 255], strides = [1, 1]} : vector<8x256xf32> to vector<8x255xf32>
    %126 = tpu.concatenate %124, %125 in 1 : vector<8x1xf32>, vector<8x255xf32> -> vector<8x256xf32>
    %127 = vector.extract_strided_slice %114 {offsets = [0, 1], sizes = [8, 255], strides = [1, 1]} : vector<8x256xf32> to vector<8x255xf32>
    %128 = vector.extract_strided_slice %114 {offsets = [0, 0], sizes = [8, 1], strides = [1, 1]} : vector<8x256xf32> to vector<8x1xf32>
    %129 = tpu.concatenate %127, %128 in 1 : vector<8x255xf32>, vector<8x1xf32> -> vector<8x256xf32>
    %130 = vector.extract_strided_slice %114 {offsets = [0, 15], sizes = [8, 241], strides = [1, 1]} : vector<8x256xf32> to vector<8x241xf32>
    %131 = vector.extract_strided_slice %114 {offsets = [0, 0], sizes = [8, 15], strides = [1, 1]} : vector<8x256xf32> to vector<8x15xf32>
    %132 = tpu.concatenate %130, %131 in 1 : vector<8x241xf32>, vector<8x15xf32> -> vector<8x256xf32>
    %133 = vector.extract_strided_slice %114 {offsets = [0, 16], sizes = [8, 240], strides = [1, 1]} : vector<8x256xf32> to vector<8x240xf32>
    %134 = vector.extract_strided_slice %114 {offsets = [0, 0], sizes = [8, 16], strides = [1, 1]} : vector<8x256xf32> to vector<8x16xf32>
    %135 = tpu.concatenate %133, %134 in 1 : vector<8x240xf32>, vector<8x16xf32> -> vector<8x256xf32>
    %136 = vector.extract_strided_slice %114 {offsets = [0, 17], sizes = [8, 239], strides = [1, 1]} : vector<8x256xf32> to vector<8x239xf32>
    %137 = vector.extract_strided_slice %114 {offsets = [0, 0], sizes = [8, 17], strides = [1, 1]} : vector<8x256xf32> to vector<8x17xf32>
    %138 = tpu.concatenate %136, %137 in 1 : vector<8x239xf32>, vector<8x17xf32> -> vector<8x256xf32>
    %139 = tpu.concatenate %117, %120, %123, %126, %114, %129, %132, %135, %138 in 0 : vector<8x256xf32>, vector<8x256xf32>, vector<8x256xf32>, vector<8x256xf32>, vector<8x256xf32>, vector<8x256xf32>, vector<8x256xf32>, vector<8x256xf32>, vector<8x256xf32> -> vector<72x256xf32>
    %c0_32 = arith.constant 0 : index
    %c0_33 = arith.constant 0 : index
    %c0_34 = arith.constant 0 : index
    %140 = vector.load %arg4[%c0_32, %c0_33, %c0_34] : memref<2x72x256xf32, #tpu.memory_space<vmem>>, vector<1x72x256xf32>
    %141 = vector.shape_cast %140 : vector<1x72x256xf32> to vector<72x256xf32>
    %142 = arith.mulf %139, %141 : vector<72x256xf32>
    %c4 = arith.constant 4 : index
    %c0_35 = arith.constant 0 : index
    %c0_36 = arith.constant 0 : index
    %143 = vector.load %arg2[%c4, %c0_35, %c0_36] : memref<5x8x72xf32, #tpu.memory_space<vmem>>, vector<1x8x72xf32>
    %144 = vector.shape_cast %143 : vector<1x8x72xf32> to vector<8x72xf32>
    %cst_37 = arith.constant dense<0.000000e+00> : vector<8x256xf32>
    %145 = tpu.matmul %144, %142, %cst_37 {dimension_numbers = #tpu.dot_dimension_numbers<[1], [0], [0], [1], [0, 0, 1, 1], [], []>} : vector<8x72xf32>, vector<72x256xf32>, vector<8x256xf32> -> vector<8x256xf32>
    %c0_38 = arith.constant 0 : index
    %c4_39 = arith.constant 4 : index
    %146 = vector.load %arg3[%c0_38, %c4_39] : memref<8x5xf32, #tpu.memory_space<vmem>>, vector<8x1xf32>
    %147 = vector.broadcast %146 : vector<8x1xf32> to vector<8x256xf32>
    %148 = arith.addf %145, %147 : vector<8x256xf32>
    %149 = arith.addf %1, %148 : vector<8x256xf32>
    %c0_40 = arith.constant 0 : index
    %c0_41 = arith.constant 0 : index
    %c0_42 = arith.constant 0 : index
    %150 = vector.load %arg5[%c0_40, %c0_41, %c0_42] : memref<1x8x256xf32, #tpu.memory_space<vmem>>, vector<1x8x256xf32>
    %151 = vector.shape_cast %150 : vector<1x8x256xf32> to vector<8x256xf32>
    %152 = vector.shape_cast %149 : vector<8x256xf32> to vector<1x8x256xf32>
    tpu.vector_store %arg5[%c0_40, %c0_41, %c0_42], %152 {strides = array<i32>} : memref<1x8x256xf32, #tpu.memory_space<vmem>>, vector<1x8x256xf32>,
    return
  }
  func.func @transform_0(%arg0: i32) -> (i32, i32, i32) {
    %c0_i32 = arith.constant 0 : i32
    %c0_i32_0 = arith.constant 0 : i32
    %c0_i32_1 = arith.constant 0 : i32
    return %arg0, %c0_i32, %c0_i32_0 : i32, i32, i32
  }
  func.func @transform_1(%arg0: i32) -> (i32, i32, i32) {
    %c0_i32 = arith.constant 0 : i32
    %c0_i32_0 = arith.constant 0 : i32
    %c0_i32_1 = arith.constant 0 : i32
    %c0_i32_2 = arith.constant 0 : i32
    return %c0_i32, %c0_i32_0, %c0_i32_1 : i32, i32, i32
  }
  func.func @transform_2(%arg0: i32) -> (i32, i32) {
    %c0_i32 = arith.constant 0 : i32
    %c0_i32_0 = arith.constant 0 : i32
    %c0_i32_1 = arith.constant 0 : i32
    return %c0_i32, %c0_i32_0 : i32, i32
  }
  func.func @transform_3(%arg0: i32) -> (i32, i32, i32) {
    %c0_i32 = arith.constant 0 : i32
    %c0_i32_0 = arith.constant 0 : i32
    %c0_i32_1 = arith.constant 0 : i32
    %c0_i32_2 = arith.constant 0 : i32
    return %c0_i32, %c0_i32_0, %c0_i32_1 : i32, i32, i32
  }
  func.func @transform_4(%arg0: i32) -> (i32, i32, i32) {
    %c0_i32 = arith.constant 0 : i32
    %c0_i32_0 = arith.constant 0 : i32
    %c0_i32_1 = arith.constant 0 : i32
    return %arg0, %c0_i32, %c0_i32_0 : i32, i32, i32
  }
}

</mosaic_0001>

<llo_original>
// kernel: tpu_custom_call.1
$region0: #{tpu_custom_call.1}
  #allocation0 [shape = 'u32[]', space=smem, size = 0x4, offset = 0x4, fixed_abs, tag = 'smem constant byte address 0x4 - core index']
  #allocation1 [shape = 'u32[144,128]{1,0:T(1,128)}', space=vmem, size = 0x12000, scoped, tag = 'internal scratch']
  %s0 = inlined_call_operand.hbm [shape: f32[2,8,256], index: 0, kind: input, shape index: {}]
  %s1 = inlined_call_operand.hbm [shape: f32[5,8,72], index: 1, kind: input, shape index: {}]
  %s2 = inlined_call_operand.hbm [shape: f32[8,5], index: 2, kind: input, shape index: {}]
  %s3 = inlined_call_operand.hbm [shape: f32[2,72,256], index: 3, kind: input, shape index: {}]
  %s4 = inlined_call_operand.hbm [shape: f32[2,8,256], index: 4, kind: output, shape index: {}]
  %s5 = sld [smem:[#allocation0]]
  $region65: #{tpu_custom_call.1} parent=0
    _
  %s7 = ssub.s32 1, %s5
  %s8 = scalar_select 0, %s7, %s5
  $region1: #{tpu_custom_call.1} parent=0
    #allocation2 [shape = 'u8[16384]{0}', space=vmem, size = 0x4000, scoped, tag = 'input window, operand 0']
    #allocation3 [shape = 's32[2]{0}', space=sflag, size = 0x8, scoped, tag = 'scoped memory for tpu_custom_call.1']
    #allocation4 [shape = 's32[2]{0}', space=sflag, size = 0x8, scoped, tag = 'scoped memory for tpu_custom_call.1']
    #allocation5 [shape = 'u8[20480]{0}', space=vmem, size = 0x5000, scoped, tag = 'input window, operand 1, single buffered']
    #allocation6 [shape = 's32[1]{0}', space=sflag, size = 0x4, scoped, tag = 'scoped memory for tpu_custom_call.1']
    #allocation7 [shape = 'u8[4096]{0}', space=vmem, size = 0x1000, scoped, tag = 'input window, operand 2, single buffered']
    #allocation8 [shape = 'u8[147456]{0}', space=vmem, size = 0x24000, scoped, tag = 'input window, operand 3, single buffered']
    #allocation9 [shape = 's32[1]{0}', space=sflag, size = 0x4, scoped, tag = 'scoped memory for tpu_custom_call.1']
    #allocation10 [shape = 'u8[16384]{0}', space=vmem, size = 0x4000, scoped, tag = 'output window, operand 0']
    %9 = vsyncpa [#allocation3], 0
    %s10 = scalar_lea.sflag [#allocation3], 1
    %11 = vsyncpa %s10, 0
    %12 = vsyncpa [#allocation6], 0
    %13 = vsyncpa [#allocation9], 0
    %14 = vsyncpa [#allocation4], 0
    %s15 = scalar_lea.sflag [#allocation4], 1
    %16 = vsyncpa %s15, 0
    loop: start=0, step=1, limit=4
    $region2: #{tpu_custom_call.1} parent=1 // loop_pre_header
      _
    $region3: #{tpu_custom_call.1} parent=1 // loop_header
      %s18 = sphi 0, %s22
      %p19 = scmp.ge.s32.totalorder %s18, 4
      %s28 = sphi 0, %s30
      %s31 = sphi 0, %s28
      %s32 = sphi 0, %s31
      %s48 = sphi 0, %s32
      %s52 = sphi 0, %s52
      %s54 = sphi 0, %s52
      %s55 = sphi 0, %s54
      %s69 = sphi 0, %s55
      %s73 = sphi 0, %s73
      %s75 = sphi 0, %s73
      %s76 = sphi 0, %s75
      %s90 = sphi 0, %s76
      %s94 = sphi 0, %s94
      %s96 = sphi 0, %s94
      %s97 = sphi 0, %s96
      %s111 = sphi 0, %s97
      %s117 = sphi 0, %s119
      %s120 = sphi 0, %s117
      %s121 = sphi 0, %s120
      %s137 = sphi 0, %s121
    $region4: #{tpu_custom_call.1} parent=1 // loop_header_branch
      %21 = sbr.rel (%p19) target = $region8
    $region5: #{tpu_custom_call.1} parent=1 // loop_body
      %s23 = ssub.s32 %s18, 1
      %s24 = ssub.s32 %s18, 2
      %s25 = sadd.s32 %s18, 1
      %s26 = ssub.s32 %s18, %s25
      %p27 = scmp.eq.s32.totalorder %s26, 0
      %s29 = sadd.s32 %s28, 1
      %s30 = scalar_select %p27, %s28, %s29
      %p33 = pneg %p27
      %p34 = scmp.eq.s32.totalorder %s18, 1
      %p35 = por %p33, %p34
      %p36 = scmp.ne.s32.totalorder %s28, %s31
      %p37 = scmp.eq.s32.totalorder %s18, 0
      %p38 = por %p36, %p37
      %p39 = scmp.ne.s32.totalorder %s28, %s31
      %p40 = scmp.eq.s32.totalorder %s23, 1
      %p41 = por %p39, %p40
      %p42 = scmp.ne.s32.totalorder %s31, %s32
      %p43 = scmp.eq.s32.totalorder %s23, 0
      %p44 = por %p42, %p43
      %p45 = scmp.ne.s32.totalorder %s31, %s32
      %p46 = scmp.eq.s32.totalorder %s24, 1
      %p47 = por %p45, %p46
      %p49 = scmp.ne.s32.totalorder %s32, %s48
      %p50 = scmp.eq.s32.totalorder %s24, 0
      %p51 = por %p49, %p50
      %s53 = sadd.s32 %s52, 1
      %p56 = scmp.eq.s32.totalorder %s18, 1
      %p57 = scmp.ne.s32.totalorder %s52, %s54
      %p58 = scmp.eq.s32.totalorder %s18, 0
      %p59 = por %p57, %p58
      %p60 = scmp.ne.s32.totalorder %s52, %s54
      %p61 = scmp.eq.s32.totalorder %s23, 1
      %p62 = por %p60, %p61
      %p63 = scmp.ne.s32.totalorder %s54, %s55
      %p64 = scmp.eq.s32.totalorder %s23, 0
      %p65 = por %p63, %p64
      %p66 = scmp.ne.s32.totalorder %s54, %s55
      %p67 = scmp.eq.s32.totalorder %s24, 1
      %p68 = por %p66, %p67
      %p70 = scmp.ne.s32.totalorder %s55, %s69
      %p71 = scmp.eq.s32.totalorder %s24, 0
      %p72 = por %p70, %p71
      %s74 = sadd.s32 %s73, 1
      %p77 = scmp.eq.s32.totalorder %s18, 1
      %p78 = scmp.ne.s32.totalorder %s73, %s75
      %p79 = scmp.eq.s32.totalorder %s18, 0
      %p80 = por %p78, %p79
      %p81 = scmp.ne.s32.totalorder %s73, %s75
      %p82 = scmp.eq.s32.totalorder %s23, 1
      %p83 = por %p81, %p82
      %p84 = scmp.ne.s32.totalorder %s75, %s76
      %p85 = scmp.eq.s32.totalorder %s23, 0
      %p86 = por %p84, %p85
      %p87 = scmp.ne.s32.totalorder %s75, %s76
      %p88 = scmp.eq.s32.totalorder %s24, 1
      %p89 = por %p87, %p88
      %p91 = scmp.ne.s32.totalorder %s76, %s90
      %p92 = scmp.eq.s32.totalorder %s24, 0
      %p93 = por %p91, %p92
      %s95 = sadd.s32 %s94, 1
      %p98 = scmp.eq.s32.totalorder %s18, 1
      %p99 = scmp.ne.s32.totalorder %s94, %s96
      %p100 = scmp.eq.s32.totalorder %s18, 0
      %p101 = por %p99, %p100
      %p102 = scmp.ne.s32.totalorder %s94, %s96
      %p103 = scmp.eq.s32.totalorder %s23, 1
      %p104 = por %p102, %p103
      %p105 = scmp.ne.s32.totalorder %s96, %s97
      %p106 = scmp.eq.s32.totalorder %s23, 0
      %p107 = por %p105, %p106
      %p108 = scmp.ne.s32.totalorder %s96, %s97
      %p109 = scmp.eq.s32.totalorder %s24, 1
      %p110 = por %p108, %p109
      %p112 = scmp.ne.s32.totalorder %s97, %s111
      %p113 = scmp.eq.s32.totalorder %s24, 0
      %p114 = por %p112, %p113
      %s115 = ssub.s32 %s18, %s25
      %p116 = scmp.eq.s32.totalorder %s115, 0
      %s118 = sadd.s32 %s117, 1
      %s119 = scalar_select %p116, %s117, %s118
      %p122 = pneg %p116
      %p123 = scmp.eq.s32.totalorder %s18, 1
      %p124 = por %p122, %p123
      %p125 = scmp.ne.s32.totalorder %s117, %s120
      %p126 = scmp.eq.s32.totalorder %s18, 0
      %p127 = por %p125, %p126
      %p128 = scmp.ne.s32.totalorder %s117, %s120
      %p129 = scmp.eq.s32.totalorder %s23, 1
      %p130 = por %p128, %p129
      %p131 = scmp.ne.s32.totalorder %s120, %s121
      %p132 = scmp.eq.s32.totalorder %s23, 0
      %p133 = por %p131, %p132
      %p134 = scmp.ne.s32.totalorder %s120, %s121
      %p135 = scmp.eq.s32.totalorder %s24, 1
      %p136 = por %p134, %p135
      %p138 = scmp.ne.s32.totalorder %s121, %s137
      %p139 = scmp.eq.s32.totalorder %s24, 0
      %p140 = por %p138, %p139
      %p141 = scmp.le.s32.totalorder 1, %s18
      %p142 = scmp.lt.s32.totalorder %s18, 3
      %p143 = pnand %p141, %p142
      %p144 = pneg %p143
      // Predicated region
      $region9: #{tpu_custom_call.1} parent=5 // pred_check
        _
      $region10: #{tpu_custom_call.1} parent=5 // pred_check_branch
        %146 = sbr.rel (%p143) target = $region12
      $region11: #{tpu_custom_call.1} parent=5 // pred_region
        %s147 = ssub.s32 %s18, 1
        // Predicated region
        $region13: #{tpu_custom_call.1} parent=11 // pred_check
          %p148 = pneg %p65
        $region14: #{tpu_custom_call.1} parent=11 // pred_check_branch
          %150 = sbr.rel (%p148) target = $region16
        $region15: #{tpu_custom_call.1} parent=11 // pred_region
          %s152 = ssub.s32 640, 640
          %153 = vsyncadd [#allocation6], %s152
          %s154 = sshll.u32 [#allocation5], 4
          %s155 = int_to_ptr.vmem [resolvable:$true] %s154
          %160 = dma.hbm_to_vmem [thread:$0]  %s1, 640, %s155, [#allocation6], 128, 128, 8
        $region16: #{tpu_custom_call.1} parent=11 // pred_fallthru
          _
        // Predicated region
        $region17: #{tpu_custom_call.1} parent=11 // pred_check
          %p161 = pneg %p86
        $region18: #{tpu_custom_call.1} parent=11 // pred_check_branch
          %163 = sbr.rel (%p161) target = $region20
        $region19: #{tpu_custom_call.1} parent=11 // pred_region
          %s165 = ssub.s32 128, 128
          %166 = vsyncadd [#allocation6], %s165
          %s168 = sshll.u32 [#allocation7], 4
          %s169 = int_to_ptr.vmem [resolvable:$true] %s168
          %171 = dma.hbm_to_vmem [thread:$0]  %s2, 128, %s169, [#allocation6]
        $region20: #{tpu_custom_call.1} parent=11 // pred_fallthru
          _
        // Predicated region
        $region21: #{tpu_custom_call.1} parent=11 // pred_check
          %p172 = pneg %p107
        $region22: #{tpu_custom_call.1} parent=11 // pred_check_branch
          %174 = sbr.rel (%p172) target = $region24
        $region23: #{tpu_custom_call.1} parent=11 // pred_region
          %s176 = ssub.s32 4608, 4608
          %177 = vsyncadd [#allocation9], %s176
          %s178 = sshll.u32 [#allocation8], 4
          %s179 = int_to_ptr.vmem [resolvable:$true] %s178
          %184 = dma.hbm_to_vmem [thread:$0]  %s3, 4608, %s179, [#allocation9], 256, 256, 16
        $region24: #{tpu_custom_call.1} parent=11 // pred_fallthru
          _
      $region12: #{tpu_custom_call.1} parent=5 // pred_fallthru
        _
      %p185 = scmp.lt.s32.totalorder %s18, 2
      // Predicated region
      $region25: #{tpu_custom_call.1} parent=5 // pred_check
        %p186 = pneg %p185
      $region26: #{tpu_custom_call.1} parent=5 // pred_check_branch
        %188 = sbr.rel (%p186) target = $region28
      $region27: #{tpu_custom_call.1} parent=5 // pred_region
        // Predicated region
        $region29: #{tpu_custom_call.1} parent=27 // pred_check
          %p189 = pneg %p38
        $region30: #{tpu_custom_call.1} parent=27 // pred_check_branch
          %191 = sbr.rel (%p189) target = $region32
        $region31: #{tpu_custom_call.1} parent=27 // pred_region
          %s192 = sand.u32 %s28, 1
          %s193 = scalar_lea.sflag [#allocation3], %s192
          %s194 = sand.u32 %s28, 1
          %s195 = smul.addr %s194, 16
          %s196 = scalar_lea.vmem [#allocation2], %s195
          %s198 = ssub.s32 256, 256
          %199 = vsyncadd %s193, %s198
          %s200 = smul.addr %s18, 2
          %s201 = smul.addr %s200, 128
          %s202 = scalar_lea.hbm %s0, %s201
          %s204 = sshll.u32 %s196, 4
          %s205 = int_to_ptr.vmem [resolvable:$true] %s204
          %207 = dma.hbm_to_vmem [thread:$0]  %s202, 256, %s205, %s193
        $region32: #{tpu_custom_call.1} parent=27 // pred_fallthru
          _
      $region28: #{tpu_custom_call.1} parent=5 // pred_fallthru
        _
      %p208 = scmp.le.s32.totalorder 1, %s18
      %p209 = scmp.lt.s32.totalorder %s18, 3
      %p210 = pnand %p208, %p209
      %p211 = pneg %p210
      // Predicated region
      $region33: #{tpu_custom_call.1} parent=5 // pred_check
        _
      $region34: #{tpu_custom_call.1} parent=5 // pred_check_branch
        %213 = sbr.rel (%p210) target = $region36
      $region35: #{tpu_custom_call.1} parent=5 // pred_region
        %s214 = ssub.s32 %s18, 1
        %s215 = sand.u32 %s31, 1
        %s216 = scalar_lea.sflag [#allocation3], %s215
        %s217 = sand.u32 %s31, 1
        %s218 = smul.addr %s217, 16
        %s219 = scalar_lea.vmem [#allocation2], %s218
        // Predicated region
        $region37: #{tpu_custom_call.1} parent=35 // pred_check
          %p220 = pneg %p44
        $region38: #{tpu_custom_call.1} parent=35 // pred_check_branch
          %222 = sbr.rel (%p220) target = $region40
        $region39: #{tpu_custom_call.1} parent=35 // pred_region
          %223 = dma.done %s216, 256
        $region40: #{tpu_custom_call.1} parent=35 // pred_fallthru
          _
        // Predicated region
        $region41: #{tpu_custom_call.1} parent=35 // pred_check
          %p224 = pneg %p65
        $region42: #{tpu_custom_call.1} parent=35 // pred_check_branch
          %226 = sbr.rel (%p224) target = $region44
        $region43: #{tpu_custom_call.1} parent=35 // pred_region
          %227 = dma.done [#allocation6], 640
        $region44: #{tpu_custom_call.1} parent=35 // pred_fallthru
          _
        // Predicated region
        $region45: #{tpu_custom_call.1} parent=35 // pred_check
          %p228 = pneg %p86
        $region46: #{tpu_custom_call.1} parent=35 // pred_check_branch
          %230 = sbr.rel (%p228) target = $region48
        $region47: #{tpu_custom_call.1} parent=35 // pred_region
          %231 = dma.done [#allocation6], 128
        $region48: #{tpu_custom_call.1} parent=35 // pred_fallthru
          _
        // Predicated region
        $region49: #{tpu_custom_call.1} parent=35 // pred_check
          %p232 = pneg %p107
        $region50: #{tpu_custom_call.1} parent=35 // pred_check_branch
          %234 = sbr.rel (%p232) target = $region52
        $region51: #{tpu_custom_call.1} parent=35 // pred_region
          %235 = dma.done [#allocation9], 4608
        $region52: #{tpu_custom_call.1} parent=35 // pred_fallthru
          _
        %s236 = sand.u32 %s31, 1
        %s237 = scalar_lea.sflag [#allocation3], %s236
        %s238 = sand.u32 %s31, 1
        %s239 = smul.addr %s238, 16
        %s240 = scalar_lea.vmem [#allocation2], %s239
        %p241 = pneg %p44
        %p242 = pneg %p41
        %p243 = pneg %p65
        %p244 = pneg %p62
        %p245 = pneg %p86
        %p246 = pneg %p83
        %p247 = pneg %p107
        %p248 = pneg %p104
        %p249 = pneg %p133
        %p250 = pneg %p130
        %s251 = sand.u32 %s120, 1
        %s252 = scalar_lea.sflag [#allocation4], %s251
        %s253 = sand.u32 %s120, 1
        %s254 = smul.addr %s253, 16
        %s255 = scalar_lea.vmem [#allocation10], %s254
        %v256 = vld [vmem:[%s219] sm:$0xff]
        %v257 = vld [vmem:[%s219 + $0x8] sm:$0xff]
        %259 = vrot.lane.b32.xlu0 %v257, 17
        %v260 = vpop.permute.xlu0 %259
        %263 = vrot.lane.b32.xlu0 %v256, 17
        %v264 = vpop.permute.xlu0 %263
        %vm265 = vcmask 138240
        %v266 = vsel %vm265, %v264, %v260
        %v269 = vsel %vm265, %v260, %v264
        %270 = vrot.lane.b32.xlu0 %v257, 16
        %v271 = vpop.permute.xlu0 %270
        %273 = vrot.lane.b32.xlu0 %v256, 16
        %v274 = vpop.permute.xlu0 %273
        %vm275 = vcmask 130048
        %v276 = vsel %vm275, %v274, %v271
        %v279 = vsel %vm275, %v271, %v274
        %280 = vrot.lane.b32.xlu0 %v257, 15
        %v281 = vpop.permute.xlu0 %280
        %283 = vrot.lane.b32.xlu0 %v256, 15
        %v284 = vpop.permute.xlu0 %283
        %vm285 = vcmask 121856
        %v286 = vsel %vm285, %v284, %v281
        %v289 = vsel %vm285, %v281, %v284
        %290 = vrot.lane.b32.xlu0 %v257, 1
        %v291 = vpop.permute.xlu0 %290
        %293 = vrot.lane.b32.xlu0 %v256, 1
        %v294 = vpop.permute.xlu0 %293
        %vm295 = vcmask 7168
        %v296 = vsel %vm295, %v294, %v291
        %v299 = vsel %vm295, %v291, %v294
        %300 = vrot.lane.b32.xlu0 %v256, 127
        %v301 = vpop.permute.xlu0 %300
        %302 = vrot.lane.b32.xlu0 %v257, 127
        %v303 = vpop.permute.xlu0 %302
        %vm304 = vcmask 1039360
        %v305 = vsel %vm304, %v301, %v303
        %v309 = vsel %vm304, %v303, %v301
        %310 = vrot.lane.b32.xlu0 %v256, 113
        %v311 = vpop.permute.xlu0 %310
        %312 = vrot.lane.b32.xlu0 %v257, 113
        %v313 = vpop.permute.xlu0 %312
        %vm314 = vcmask 924672
        %v315 = vsel %vm314, %v311, %v313
        %v319 = vsel %vm314, %v313, %v311
        %320 = vrot.lane.b32.xlu0 %v256, 112
        %v321 = vpop.permute.xlu0 %320
        %322 = vrot.lane.b32.xlu0 %v257, 112
        %v323 = vpop.permute.xlu0 %322
        %vm324 = vcmask 916480
        %v325 = vsel %vm324, %v321, %v323
        %v329 = vsel %vm324, %v323, %v321
        %330 = vrot.lane.b32.xlu0 %v256, 111
        %v331 = vpop.permute.xlu0 %330
        %332 = vrot.lane.b32.xlu0 %v257, 111
        %v333 = vpop.permute.xlu0 %332
        %vm334 = vcmask 908288
        %v335 = vsel %vm334, %v331, %v333
        %v339 = vsel %vm334, %v333, %v331
        %v340 = vld [vmem:[#allocation8] sm:$0xff]
        %v341 = vld [vmem:[#allocation8 + $0x8] sm:$0xff]
        %v342 = vld [vmem:[#allocation8 + $0x10] sm:$0xff]
        %v343 = vld [vmem:[#allocation8 + $0x18] sm:$0xff]
        %v344 = vld [vmem:[#allocation8 + $0x20] sm:$0xff]
        %v345 = vld [vmem:[#allocation8 + $0x28] sm:$0xff]
        %v346 = vld [vmem:[#allocation8 + $0x30] sm:$0xff]
        %v347 = vld [vmem:[#allocation8 + $0x38] sm:$0xff]
        %v348 = vld [vmem:[#allocation8 + $0x40] sm:$0xff]
        %v349 = vld [vmem:[#allocation8 + $0x48] sm:$0xff]
        %v350 = vld [vmem:[#allocation8 + $0x50] sm:$0xff]
        %v351 = vld [vmem:[#allocation8 + $0x58] sm:$0xff]
        %v352 = vld [vmem:[#allocation8 + $0x60] sm:$0xff]
        %v353 = vld [vmem:[#allocation8 + $0x68] sm:$0xff]
        %v354 = vld [vmem:[#allocation8 + $0x70] sm:$0xff]
        %v355 = vld [vmem:[#allocation8 + $0x78] sm:$0xff]
        %v356 = vld [vmem:[#allocation8 + $0x80] sm:$0xff]
        %v357 = vld [vmem:[#allocation8 + $0x88] sm:$0xff]
        %v358 = vmul.f32 %v269, %v340
        %v359 = vmul.f32 %v266, %v341
        %v360 = vmul.f32 %v279, %v342
        %v361 = vmul.f32 %v276, %v343
        %v362 = vmul.f32 %v289, %v344
        %v363 = vmul.f32 %v286, %v345
        %v364 = vmul.f32 %v299, %v346
        %v365 = vmul.f32 %v296, %v347
        %v366 = vmul.f32 %v256, %v348
        %v367 = vmul.f32 %v257, %v349
        %v368 = vmul.f32 %v305, %v350
        %v369 = vmul.f32 %v309, %v351
        %v370 = vmul.f32 %v315, %v352
        %v371 = vmul.f32 %v319, %v353
        %v372 = vmul.f32 %v325, %v354
        %v373 = vmul.f32 %v329, %v355
        %v374 = vmul.f32 %v335, %v356
        %v375 = vmul.f32 %v339, %v357
        %v376 = vld [vmem:[#allocation5] sm:$0xff]
        %v377 = vld [vmem:[#allocation7] sm:$0xff]
        %379 = vset.pattern.permute.xlu0 0
        %380 = vperm.xlu0 %379, %v377
        %v381 = vpop.permute.xlu0 %380
        %vm383 = vcmask 588800
        %v385 = vsel %vm383, %v376, 0
        %387 = vmatprep.subr.mxu0 0.0
        %388 = vmatpush1.msra.mxu0 0.0
        %389 = vmatprep.subr.mxu0 0.0
        %390 = vmatpush1.msra.mxu0 0.0
        %391 = vmatprep.subr.mxu0 0.0
        %392 = vmatpush1.msra.mxu0 0.0
        %393 = vmatprep.subr.mxu0 0.0
        %394 = vmatpush1.msra.mxu0 0.0
        %395 = vmatprep.subr.mxu0 0.0
        %396 = vmatpush1.msra.mxu0 0.0
        %397 = vmatprep.subr.mxu0 0.0
        %398 = vmatpush1.msra.mxu0 0.0
        %399 = vmatprep.subr.mxu0 0.0
        %400 = vmatpush1.msra.mxu0 0.0
        %401 = vmatprep.subr.mxu0 %v375
        %402 = vmatpush1.msra.mxu0 %v374
        %403 = vmatprep.subr.mxu0 %v373
        %404 = vmatpush1.msra.mxu0 %v372
        %405 = vmatprep.subr.mxu0 %v371
        %406 = vmatpush1.msra.mxu0 %v370
        %407 = vmatprep.subr.mxu0 %v369
        %408 = vmatpush1.msra.mxu0 %v368
        %409 = vmatprep.subr.mxu0 %v367
        %410 = vmatpush1.msra.mxu0 %v366
        %411 = vmatprep.subr.mxu0 %v365
        %412 = vmatpush1.msra.mxu0 %v364
        %413 = vmatprep.subr.mxu0 %v363
        %414 = vmatpush1.msra.mxu0 %v362
        %415 = vmatprep.subr.mxu0 %v361
        %416 = vmatpush1.msra.mxu0 %v360
        %417 = vmatprep.subr.mxu0 %v359
        %418 = vmatpush1.msra.mxu0 %v358
        %419 = vmatprep.subr.mxu0 0.0
        %420 = vmatpush2.msra.mxu0 0.0
        %421 = vmatprep.subr.mxu0 0.0
        %422 = vmatpush2.msra.mxu0 0.0
        %423 = vmatprep.subr.mxu0 0.0
        %424 = vmatpush2.msra.mxu0 0.0
        %425 = vmatprep.subr.mxu0 0.0
        %426 = vmatpush2.msra.mxu0 0.0
        %427 = vmatprep.subr.mxu0 0.0
        %428 = vmatpush2.msra.mxu0 0.0
        %429 = vmatprep.subr.mxu0 0.0
        %430 = vmatpush2.msra.mxu0 0.0
        %431 = vmatprep.subr.mxu0 0.0
        %432 = vmatpush2.msra.mxu0 0.0
        %433 = vmatprep.subr.mxu0 0.0
        %434 = vmatpush2.msra.mxu0 0.0
        %435 = vmatprep.subr.mxu0 0.0
        %436 = vmatpush2.msra.mxu0 0.0
        %437 = vmatprep.subr.mxu0 0.0
        %438 = vmatpush2.msra.mxu0 0.0
        %439 = vmatprep.subr.mxu0 0.0
        %440 = vmatpush2.msra.mxu0 0.0
        %441 = vmatprep.subr.mxu0 0.0
        %442 = vmatpush2.msra.mxu0 0.0
        %443 = vmatprep.subr.mxu0 0.0
        %444 = vmatpush2.msra.mxu0 0.0
        %445 = vmatprep.subr.mxu0 0.0
        %446 = vmatpush2.msra.mxu0 0.0
        %447 = vmatprep.subr.mxu0 0.0
        %448 = vmatpush2.msra.mxu0 0.0
        %449 = vmatprep.subr.mxu0 0.0
        %450 = vmatpush2.msra.mxu0 0.0
        %451 = vmatprep.mubr.f32.mxu0 0.0
        %452 = vmatmul.mubr.f32.gmra.mxu0 %v385
        %v453 = vpop.f32.mrf.mxu0
        %v454 = vadd.f32 %v381, %v453
        %v455 = vpop.f32.mrf.mxu0
        %v456 = vadd.f32 %v381, %v455
        %457 = vdwg.mxu0
        %v458 = vmax.f32 %v454, 0.0
        %v459 = vmax.f32 %v456, 0.0
        %461 = vrot.lane.b32.xlu0 %v459, 17
        %v462 = vpop.permute.xlu0 %461
        %465 = vrot.lane.b32.xlu0 %v458, 17
        %v466 = vpop.permute.xlu0 %465
        %v467 = vsel %vm265, %v466, %v462
        %v470 = vsel %vm265, %v462, %v466
        %471 = vrot.lane.b32.xlu0 %v459, 16
        %v472 = vpop.permute.xlu0 %471
        %474 = vrot.lane.b32.xlu0 %v458, 16
        %v475 = vpop.permute.xlu0 %474
        %v476 = vsel %vm275, %v475, %v472
        %v479 = vsel %vm275, %v472, %v475
        %480 = vrot.lane.b32.xlu0 %v459, 15
        %v481 = vpop.permute.xlu0 %480
        %483 = vrot.lane.b32.xlu0 %v458, 15
        %v484 = vpop.permute.xlu0 %483
        %v485 = vsel %vm285, %v484, %v481
        %v488 = vsel %vm285, %v481, %v484
        %489 = vrot.lane.b32.xlu0 %v459, 1
        %v490 = vpop.permute.xlu0 %489
        %492 = vrot.lane.b32.xlu0 %v458, 1
        %v493 = vpop.permute.xlu0 %492
        %v494 = vsel %vm295, %v493, %v490
        %v497 = vsel %vm295, %v490, %v493
        %498 = vrot.lane.b32.xlu0 %v458, 127
        %v499 = vpop.permute.xlu0 %498
        %500 = vrot.lane.b32.xlu0 %v459, 127
        %v501 = vpop.permute.xlu0 %500
        %v502 = vsel %vm304, %v499, %v501
        %v506 = vsel %vm304, %v501, %v499
        %507 = vrot.lane.b32.xlu0 %v458, 113
        %v508 = vpop.permute.xlu0 %507
        %509 = vrot.lane.b32.xlu0 %v459, 113
        %v510 = vpop.permute.xlu0 %509
        %v511 = vsel %vm314, %v508, %v510
        %v515 = vsel %vm314, %v510, %v508
        %516 = vrot.lane.b32.xlu0 %v458, 112
        %v517 = vpop.permute.xlu0 %516
        %518 = vrot.lane.b32.xlu0 %v459, 112
        %v519 = vpop.permute.xlu0 %518
        %v520 = vsel %vm324, %v517, %v519
        %v524 = vsel %vm324, %v519, %v517
        %525 = vrot.lane.b32.xlu0 %v458, 111
        %v526 = vpop.permute.xlu0 %525
        %527 = vrot.lane.b32.xlu0 %v459, 111
        %v528 = vpop.permute.xlu0 %527
        %v529 = vsel %vm334, %v526, %v528
        %v533 = vsel %vm334, %v528, %v526
        %v534 = vmul.f32 %v470, %v340
        %v535 = vmul.f32 %v467, %v341
        %v536 = vmul.f32 %v479, %v342
        %v537 = vmul.f32 %v476, %v343
        %v538 = vmul.f32 %v488, %v344
        %v539 = vmul.f32 %v485, %v345
        %v540 = vmul.f32 %v497, %v346
        %v541 = vmul.f32 %v494, %v347
        %v542 = vmul.f32 %v458, %v348
        %v543 = vmul.f32 %v459, %v349
        %v544 = vmul.f32 %v502, %v350
        %v545 = vmul.f32 %v506, %v351
        %v546 = vmul.f32 %v511, %v352
        %v547 = vmul.f32 %v515, %v353
        %v548 = vmul.f32 %v520, %v354
        %v549 = vmul.f32 %v524, %v355
        %v550 = vmul.f32 %v529, %v356
        %v551 = vmul.f32 %v533, %v357
        %s552 = scalar_lea.vmem [#allocation5], 8
        %v553 = vld [vmem:[%s552] sm:$0xff]
        %554 = vset.pattern.permute.xlu0 1
        %555 = vperm.xlu0 %554, %v377
        %v556 = vpop.permute.xlu0 %555
        %v559 = vsel %vm383, %v553, 0
        %561 = vmatprep.subr.mxu0 0.0
        %562 = vmatpush1.msra.mxu0 0.0
        %563 = vmatprep.subr.mxu0 0.0
        %564 = vmatpush1.msra.mxu0 0.0
        %565 = vmatprep.subr.mxu0 0.0
        %566 = vmatpush1.msra.mxu0 0.0
        %567 = vmatprep.subr.mxu0 0.0
        %568 = vmatpush1.msra.mxu0 0.0
        %569 = vmatprep.subr.mxu0 0.0
        %570 = vmatpush1.msra.mxu0 0.0
        %571 = vmatprep.subr.mxu0 0.0
        %572 = vmatpush1.msra.mxu0 0.0
        %573 = vmatprep.subr.mxu0 0.0
        %574 = vmatpush1.msra.mxu0 0.0
        %575 = vmatprep.subr.mxu0 %v551
        %576 = vmatpush1.msra.mxu0 %v550
        %577 = vmatprep.subr.mxu0 %v549
        %578 = vmatpush1.msra.mxu0 %v548
        %579 = vmatprep.subr.mxu0 %v547
        %580 = vmatpush1.msra.mxu0 %v546
        %581 = vmatprep.subr.mxu0 %v545
        %582 = vmatpush1.msra.mxu0 %v544
        %583 = vmatprep.subr.mxu0 %v543
        %584 = vmatpush1.msra.mxu0 %v542
        %585 = vmatprep.subr.mxu0 %v541
        %586 = vmatpush1.msra.mxu0 %v540
        %587 = vmatprep.subr.mxu0 %v539
        %588 = vmatpush1.msra.mxu0 %v538
        %589 = vmatprep.subr.mxu0 %v537
        %590 = vmatpush1.msra.mxu0 %v536
        %591 = vmatprep.subr.mxu0 %v535
        %592 = vmatpush1.msra.mxu0 %v534
        %593 = vmatprep.subr.mxu0 0.0
        %594 = vmatpush2.msra.mxu0 0.0
        %595 = vmatprep.subr.mxu0 0.0
        %596 = vmatpush2.msra.mxu0 0.0
        %597 = vmatprep.subr.mxu0 0.0
        %598 = vmatpush2.msra.mxu0 0.0
        %599 = vmatprep.subr.mxu0 0.0
        %600 = vmatpush2.msra.mxu0 0.0
        %601 = vmatprep.subr.mxu0 0.0
        %602 = vmatpush2.msra.mxu0 0.0
        %603 = vmatprep.subr.mxu0 0.0
        %604 = vmatpush2.msra.mxu0 0.0
        %605 = vmatprep.subr.mxu0 0.0
        %606 = vmatpush2.msra.mxu0 0.0
        %607 = vmatprep.subr.mxu0 0.0
        %608 = vmatpush2.msra.mxu0 0.0
        %609 = vmatprep.subr.mxu0 0.0
        %610 = vmatpush2.msra.mxu0 0.0
        %611 = vmatprep.subr.mxu0 0.0
        %612 = vmatpush2.msra.mxu0 0.0
        %613 = vmatprep.subr.mxu0 0.0
        %614 = vmatpush2.msra.mxu0 0.0
        %615 = vmatprep.subr.mxu0 0.0
        %616 = vmatpush2.msra.mxu0 0.0
        %617 = vmatprep.subr.mxu0 0.0
        %618 = vmatpush2.msra.mxu0 0.0
        %619 = vmatprep.subr.mxu0 0.0
        %620 = vmatpush2.msra.mxu0 0.0
        %621 = vmatprep.subr.mxu0 0.0
        %622 = vmatpush2.msra.mxu0 0.0
        %623 = vmatprep.subr.mxu0 0.0
        %624 = vmatpush2.msra.mxu0 0.0
        %625 = vmatprep.mubr.f32.mxu0 0.0
        %626 = vmatmul.mubr.f32.gmra.mxu0 %v559
        %v627 = vpop.f32.mrf.mxu0
        %v628 = vadd.f32 %v556, %v627
        %v629 = vpop.f32.mrf.mxu0
        %v630 = vadd.f32 %v556, %v629
        %631 = vdwg.mxu0
        %632 = vrot.lane.b32.xlu0 %v459, 34
        %v633 = vpop.permute.xlu0 %632
        %635 = vrot.lane.b32.xlu0 %v458, 34
        %v636 = vpop.permute.xlu0 %635
        %vm637 = vcmask 277504
        %v638 = vsel %vm637, %v636, %v633
        %v641 = vsel %vm637, %v633, %v636
        %642 = vrot.lane.b32.xlu0 %v459, 32
        %v643 = vpop.permute.xlu0 %642
        %645 = vrot.lane.b32.xlu0 %v458, 32
        %v646 = vpop.permute.xlu0 %645
        %vm647 = vcmask 261120
        %v648 = vsel %vm647, %v646, %v643
        %v651 = vsel %vm647, %v643, %v646
        %652 = vrot.lane.b32.xlu0 %v459, 30
        %v653 = vpop.permute.xlu0 %652
        %655 = vrot.lane.b32.xlu0 %v458, 30
        %v656 = vpop.permute.xlu0 %655
        %vm657 = vcmask 244736
        %v658 = vsel %vm657, %v656, %v653
        %v661 = vsel %vm657, %v653, %v656
        %662 = vrot.lane.b32.xlu0 %v459, 2
        %v663 = vpop.permute.xlu0 %662
        %665 = vrot.lane.b32.xlu0 %v458, 2
        %v666 = vpop.permute.xlu0 %665
        %vm667 = vcmask 15360
        %v668 = vsel %vm667, %v666, %v663
        %v671 = vsel %vm667, %v663, %v666
        %672 = vrot.lane.b32.xlu0 %v458, 126
        %v673 = vpop.permute.xlu0 %672
        %674 = vrot.lane.b32.xlu0 %v459, 126
        %v675 = vpop.permute.xlu0 %674
        %vm676 = vcmask 1031168
        %v677 = vsel %vm676, %v673, %v675
        %v681 = vsel %vm676, %v675, %v673
        %682 = vrot.lane.b32.xlu0 %v458, 98
        %v683 = vpop.permute.xlu0 %682
        %684 = vrot.lane.b32.xlu0 %v459, 98
        %v685 = vpop.permute.xlu0 %684
        %vm686 = vcmask 801792
        %v687 = vsel %vm686, %v683, %v685
        %v691 = vsel %vm686, %v685, %v683
        %692 = vrot.lane.b32.xlu0 %v458, 96
        %v693 = vpop.permute.xlu0 %692
        %694 = vrot.lane.b32.xlu0 %v459, 96
        %v695 = vpop.permute.xlu0 %694
        %vm696 = vcmask 785408
        %v697 = vsel %vm696, %v693, %v695
        %v701 = vsel %vm696, %v695, %v693
        %702 = vrot.lane.b32.xlu0 %v458, 94
        %v703 = vpop.permute.xlu0 %702
        %704 = vrot.lane.b32.xlu0 %v459, 94
        %v705 = vpop.permute.xlu0 %704
        %vm706 = vcmask 769024
        %v707 = vsel %vm706, %v703, %v705
        %v711 = vsel %vm706, %v705, %v703
        %s712 = scalar_lea.vmem [#allocation8], 144
        %v713 = vld [vmem:[%s712] sm:$0xff]
        %v714 = vld [vmem:[%s712 + $0x8] sm:$0xff]
        %v715 = vld [vmem:[%s712 + $0x10] sm:$0xff]
        %v716 = vld [vmem:[%s712 + $0x18] sm:$0xff]
        %v717 = vld [vmem:[%s712 + $0x20] sm:$0xff]
        %v718 = vld [vmem:[%s712 + $0x28] sm:$0xff]
        %v719 = vld [vmem:[%s712 + $0x30] sm:$0xff]
        %v720 = vld [vmem:[%s712 + $0x38] sm:$0xff]
        %v721 = vld [vmem:[%s712 + $0x40] sm:$0xff]
        %v722 = vld [vmem:[%s712 + $0x48] sm:$0xff]
        %v723 = vld [vmem:[%s712 + $0x50] sm:$0xff]
        %v724 = vld [vmem:[%s712 + $0x58] sm:$0xff]
        %v725 = vld [vmem:[%s712 + $0x60] sm:$0xff]
        %v726 = vld [vmem:[%s712 + $0x68] sm:$0xff]
        %v727 = vld [vmem:[%s712 + $0x70] sm:$0xff]
        %v728 = vld [vmem:[%s712 + $0x78] sm:$0xff]
        %v729 = vld [vmem:[%s712 + $0x80] sm:$0xff]
        %v730 = vld [vmem:[%s712 + $0x88] sm:$0xff]
        %v731 = vmul.f32 %v641, %v713
        %v732 = vmul.f32 %v638, %v714
        %v733 = vmul.f32 %v651, %v715
        %v734 = vmul.f32 %v648, %v716
        %v735 = vmul.f32 %v661, %v717
        %v736 = vmul.f32 %v658, %v718
        %v737 = vmul.f32 %v671, %v719
        %v738 = vmul.f32 %v668, %v720
        %v739 = vmul.f32 %v458, %v721
        %v740 = vmul.f32 %v459, %v722
        %v741 = vmul.f32 %v677, %v723
        %v742 = vmul.f32 %v681, %v724
        %v743 = vmul.f32 %v687, %v725
        %v744 = vmul.f32 %v691, %v726
        %v745 = vmul.f32 %v697, %v727
        %v746 = vmul.f32 %v701, %v728
        %v747 = vmul.f32 %v707, %v729
        %v748 = vmul.f32 %v711, %v730
        %s749 = scalar_lea.vmem [#allocation5], 16
        %v750 = vld [vmem:[%s749] sm:$0xff]
        %751 = vset.pattern.permute.xlu0 2
        %752 = vperm.xlu0 %751, %v377
        %v753 = vpop.permute.xlu0 %752
        %v756 = vsel %vm383, %v750, 0
        %758 = vmatprep.subr.mxu0 0.0
        %759 = vmatpush1.msra.mxu0 0.0
        %760 = vmatprep.subr.mxu0 0.0
        %761 = vmatpush1.msra.mxu0 0.0
        %762 = vmatprep.subr.mxu0 0.0
        %763 = vmatpush1.msra.mxu0 0.0
        %764 = vmatprep.subr.mxu0 0.0
        %765 = vmatpush1.msra.mxu0 0.0
        %766 = vmatprep.subr.mxu0 0.0
        %767 = vmatpush1.msra.mxu0 0.0
        %768 = vmatprep.subr.mxu0 0.0
        %769 = vmatpush1.msra.mxu0 0.0
        %770 = vmatprep.subr.mxu0 0.0
        %771 = vmatpush1.msra.mxu0 0.0
        %772 = vmatprep.subr.mxu0 %v748
        %773 = vmatpush1.msra.mxu0 %v747
        %774 = vmatprep.subr.mxu0 %v746
        %775 = vmatpush1.msra.mxu0 %v745
        %776 = vmatprep.subr.mxu0 %v744
        %777 = vmatpush1.msra.mxu0 %v743
        %778 = vmatprep.subr.mxu0 %v742
        %779 = vmatpush1.msra.mxu0 %v741
        %780 = vmatprep.subr.mxu0 %v740
        %781 = vmatpush1.msra.mxu0 %v739
        %782 = vmatprep.subr.mxu0 %v738
        %783 = vmatpush1.msra.mxu0 %v737
        %784 = vmatprep.subr.mxu0 %v736
        %785 = vmatpush1.msra.mxu0 %v735
        %786 = vmatprep.subr.mxu0 %v734
        %787 = vmatpush1.msra.mxu0 %v733
        %788 = vmatprep.subr.mxu0 %v732
        %789 = vmatpush1.msra.mxu0 %v731
        %790 = vmatprep.subr.mxu0 0.0
        %791 = vmatpush2.msra.mxu0 0.0
        %792 = vmatprep.subr.mxu0 0.0
        %793 = vmatpush2.msra.mxu0 0.0
        %794 = vmatprep.subr.mxu0 0.0
        %795 = vmatpush2.msra.mxu0 0.0
        %796 = vmatprep.subr.mxu0 0.0
        %797 = vmatpush2.msra.mxu0 0.0
        %798 = vmatprep.subr.mxu0 0.0
        %799 = vmatpush2.msra.mxu0 0.0
        %800 = vmatprep.subr.mxu0 0.0
        %801 = vmatpush2.msra.mxu0 0.0
        %802 = vmatprep.subr.mxu0 0.0
        %803 = vmatpush2.msra.mxu0 0.0
        %804 = vmatprep.subr.mxu0 0.0
        %805 = vmatpush2.msra.mxu0 0.0
        %806 = vmatprep.subr.mxu0 0.0
        %807 = vmatpush2.msra.mxu0 0.0
        %808 = vmatprep.subr.mxu0 0.0
        %809 = vmatpush2.msra.mxu0 0.0
        %810 = vmatprep.subr.mxu0 0.0
        %811 = vmatpush2.msra.mxu0 0.0
        %812 = vmatprep.subr.mxu0 0.0
        %813 = vmatpush2.msra.mxu0 0.0
        %814 = vmatprep.subr.mxu0 0.0
        %815 = vmatpush2.msra.mxu0 0.0
        %816 = vmatprep.subr.mxu0 0.0
        %817 = vmatpush2.msra.mxu0 0.0
        %818 = vmatprep.subr.mxu0 0.0
        %819 = vmatpush2.msra.mxu0 0.0
        %820 = vmatprep.subr.mxu0 0.0
        %821 = vmatpush2.msra.mxu0 0.0
        %822 = vmatprep.mubr.f32.mxu0 0.0
        %823 = vmatmul.mubr.f32.gmra.mxu0 %v756
        %v824 = vpop.f32.mrf.mxu0
        %v825 = vadd.f32 %v753, %v824
        %v826 = vpop.f32.mrf.mxu0
        %v827 = vadd.f32 %v753, %v826
        %828 = vdwg.mxu0
        %s829 = scalar_lea.vmem [#allocation5], 24
        %v830 = vld [vmem:[%s829] sm:$0xff]
        %831 = vset.pattern.permute.xlu0 3
        %832 = vperm.xlu0 %831, %v377
        %v833 = vpop.permute.xlu0 %832
        %v836 = vsel %vm275, %v830, 0
        %838 = vmatprep.subr.mxu0 0.0
        %839 = vmatpush1.msra.mxu0 0.0
        %840 = vmatprep.subr.mxu0 0.0
        %841 = vmatpush1.msra.mxu0 0.0
        %842 = vmatprep.subr.mxu0 0.0
        %843 = vmatpush1.msra.mxu0 0.0
        %844 = vmatprep.subr.mxu0 0.0
        %845 = vmatpush1.msra.mxu0 0.0
        %846 = vmatprep.subr.mxu0 0.0
        %847 = vmatpush1.msra.mxu0 0.0
        %848 = vmatprep.subr.mxu0 0.0
        %849 = vmatpush1.msra.mxu0 0.0
        %850 = vmatprep.subr.mxu0 0.0
        %851 = vmatpush1.msra.mxu0 0.0
        %852 = vmatprep.subr.mxu0 0.0
        %853 = vmatpush1.msra.mxu0 0.0
        %854 = vmatprep.subr.mxu0 0.0
        %855 = vmatpush1.msra.mxu0 0.0
        %856 = vmatprep.subr.mxu0 0.0
        %857 = vmatpush1.msra.mxu0 0.0
        %858 = vmatprep.subr.mxu0 0.0
        %859 = vmatpush1.msra.mxu0 0.0
        %860 = vmatprep.subr.mxu0 0.0
        %861 = vmatpush1.msra.mxu0 0.0
        %862 = vmatprep.subr.mxu0 0.0
        %863 = vmatpush1.msra.mxu0 0.0
        %864 = vmatprep.subr.mxu0 0.0
        %865 = vmatpush1.msra.mxu0 0.0
        %866 = vmatprep.subr.mxu0 %v827
        %867 = vmatpush1.msra.mxu0 %v825
        %868 = vmatprep.subr.mxu0 %v630
        %869 = vmatpush1.msra.mxu0 %v628
        %870 = vmatprep.subr.mxu0 0.0
        %871 = vmatpush2.msra.mxu0 0.0
        %872 = vmatprep.subr.mxu0 0.0
        %873 = vmatpush2.msra.mxu0 0.0
        %874 = vmatprep.subr.mxu0 0.0
        %875 = vmatpush2.msra.mxu0 0.0
        %876 = vmatprep.subr.mxu0 0.0
        %877 = vmatpush2.msra.mxu0 0.0
        %878 = vmatprep.subr.mxu0 0.0
        %879 = vmatpush2.msra.mxu0 0.0
        %880 = vmatprep.subr.mxu0 0.0
        %881 = vmatpush2.msra.mxu0 0.0
        %882 = vmatprep.subr.mxu0 0.0
        %883 = vmatpush2.msra.mxu0 0.0
        %884 = vmatprep.subr.mxu0 0.0
        %885 = vmatpush2.msra.mxu0 0.0
        %886 = vmatprep.subr.mxu0 0.0
        %887 = vmatpush2.msra.mxu0 0.0
        %888 = vmatprep.subr.mxu0 0.0
        %889 = vmatpush2.msra.mxu0 0.0
        %890 = vmatprep.subr.mxu0 0.0
        %891 = vmatpush2.msra.mxu0 0.0
        %892 = vmatprep.subr.mxu0 0.0
        %893 = vmatpush2.msra.mxu0 0.0
        %894 = vmatprep.subr.mxu0 0.0
        %895 = vmatpush2.msra.mxu0 0.0
        %896 = vmatprep.subr.mxu0 0.0
        %897 = vmatpush2.msra.mxu0 0.0
        %898 = vmatprep.subr.mxu0 0.0
        %899 = vmatpush2.msra.mxu0 0.0
        %900 = vmatprep.subr.mxu0 0.0
        %901 = vmatpush2.msra.mxu0 0.0
        %902 = vmatprep.mubr.f32.mxu0 0.0
        %903 = vmatmul.mubr.f32.gmra.mxu0 %v836
        %v904 = vpop.f32.mrf.mxu0
        %v905 = vadd.f32 %v833, %v904
        %v906 = vpop.f32.mrf.mxu0
        %v907 = vadd.f32 %v833, %v906
        %908 = vdwg.mxu0
        %v909 = vadd.f32 %v458, %v905
        %v910 = vadd.f32 %v459, %v907
        %912 = vrot.lane.b32.xlu0 %v910, 17
        %v913 = vpop.permute.xlu0 %912
        %916 = vrot.lane.b32.xlu0 %v909, 17
        %v917 = vpop.permute.xlu0 %916
        %v918 = vsel %vm265, %v917, %v913
        %v921 = vsel %vm265, %v913, %v917
        %922 = vrot.lane.b32.xlu0 %v910, 16
        %v923 = vpop.permute.xlu0 %922
        %925 = vrot.lane.b32.xlu0 %v909, 16
        %v926 = vpop.permute.xlu0 %925
        %v927 = vsel %vm275, %v926, %v923
        %v930 = vsel %vm275, %v923, %v926
        %931 = vrot.lane.b32.xlu0 %v910, 15
        %v932 = vpop.permute.xlu0 %931
        %934 = vrot.lane.b32.xlu0 %v909, 15
        %v935 = vpop.permute.xlu0 %934
        %v936 = vsel %vm285, %v935, %v932
        %v939 = vsel %vm285, %v932, %v935
        %940 = vrot.lane.b32.xlu0 %v910, 1
        %v941 = vpop.permute.xlu0 %940
        %943 = vrot.lane.b32.xlu0 %v909, 1
        %v944 = vpop.permute.xlu0 %943
        %v945 = vsel %vm295, %v944, %v941
        %v948 = vsel %vm295, %v941, %v944
        %949 = vrot.lane.b32.xlu0 %v909, 127
        %v950 = vpop.permute.xlu0 %949
        %951 = vrot.lane.b32.xlu0 %v910, 127
        %v952 = vpop.permute.xlu0 %951
        %v953 = vsel %vm304, %v950, %v952
        %v957 = vsel %vm304, %v952, %v950
        %958 = vrot.lane.b32.xlu0 %v909, 113
        %v959 = vpop.permute.xlu0 %958
        %960 = vrot.lane.b32.xlu0 %v910, 113
        %v961 = vpop.permute.xlu0 %960
        %v962 = vsel %vm314, %v959, %v961
        %v966 = vsel %vm314, %v961, %v959
        %967 = vrot.lane.b32.xlu0 %v909, 112
        %v968 = vpop.permute.xlu0 %967
        %969 = vrot.lane.b32.xlu0 %v910, 112
        %v970 = vpop.permute.xlu0 %969
        %v971 = vsel %vm324, %v968, %v970
        %v975 = vsel %vm324, %v970, %v968
        %976 = vrot.lane.b32.xlu0 %v909, 111
        %v977 = vpop.permute.xlu0 %976
        %978 = vrot.lane.b32.xlu0 %v910, 111
        %v979 = vpop.permute.xlu0 %978
        %v980 = vsel %vm334, %v977, %v979
        %v984 = vsel %vm334, %v979, %v977
        %v985 = vmul.f32 %v921, %v340
        %v986 = vmul.f32 %v918, %v341
        %v987 = vmul.f32 %v930, %v342
        %v988 = vmul.f32 %v927, %v343
        %v989 = vmul.f32 %v939, %v344
        %v990 = vmul.f32 %v936, %v345
        %v991 = vmul.f32 %v948, %v346
        %v992 = vmul.f32 %v945, %v347
        %v993 = vmul.f32 %v909, %v348
        %v994 = vmul.f32 %v910, %v349
        %v995 = vmul.f32 %v953, %v350
        %v996 = vmul.f32 %v957, %v351
        %v997 = vmul.f32 %v962, %v352
        %v998 = vmul.f32 %v966, %v353
        %v999 = vmul.f32 %v971, %v354
        %v1000 = vmul.f32 %v975, %v355
        %v1001 = vmul.f32 %v980, %v356
        %v1002 = vmul.f32 %v984, %v357
        %s1003 = scalar_lea.vmem [#allocation5], 32
        %v1004 = vld [vmem:[%s1003] sm:$0xff]
        %1005 = vset.pattern.permute.xlu0 4
        %1006 = vperm.xlu0 %1005, %v377
        %v1007 = vpop.permute.xlu0 %1006
        %v1010 = vsel %vm383, %v1004, 0
        %1012 = vmatprep.subr.mxu0 0.0
        %1013 = vmatpush1.msra.mxu0 0.0
        %1014 = vmatprep.subr.mxu0 0.0
        %1015 = vmatpush1.msra.mxu0 0.0
        %1016 = vmatprep.subr.mxu0 0.0
        %1017 = vmatpush1.msra.mxu0 0.0
        %1018 = vmatprep.subr.mxu0 0.0
        %1019 = vmatpush1.msra.mxu0 0.0
        %1020 = vmatprep.subr.mxu0 0.0
        %1021 = vmatpush1.msra.mxu0 0.0
        %1022 = vmatprep.subr.mxu0 0.0
        %1023 = vmatpush1.msra.mxu0 0.0
        %1024 = vmatprep.subr.mxu0 0.0
        %1025 = vmatpush1.msra.mxu0 0.0
        %1026 = vmatprep.subr.mxu0 %v1002
        %1027 = vmatpush1.msra.mxu0 %v1001
        %1028 = vmatprep.subr.mxu0 %v1000
        %1029 = vmatpush1.msra.mxu0 %v999
        %1030 = vmatprep.subr.mxu0 %v998
        %1031 = vmatpush1.msra.mxu0 %v997
        %1032 = vmatprep.subr.mxu0 %v996
        %1033 = vmatpush1.msra.mxu0 %v995
        %1034 = vmatprep.subr.mxu0 %v994
        %1035 = vmatpush1.msra.mxu0 %v993
        %1036 = vmatprep.subr.mxu0 %v992
        %1037 = vmatpush1.msra.mxu0 %v991
        %1038 = vmatprep.subr.mxu0 %v990
        %1039 = vmatpush1.msra.mxu0 %v989
        %1040 = vmatprep.subr.mxu0 %v988
        %1041 = vmatpush1.msra.mxu0 %v987
        %1042 = vmatprep.subr.mxu0 %v986
        %1043 = vmatpush1.msra.mxu0 %v985
        %1044 = vmatprep.subr.mxu0 0.0
        %1045 = vmatpush2.msra.mxu0 0.0
        %1046 = vmatprep.subr.mxu0 0.0
        %1047 = vmatpush2.msra.mxu0 0.0
        %1048 = vmatprep.subr.mxu0 0.0
        %1049 = vmatpush2.msra.mxu0 0.0
        %1050 = vmatprep.subr.mxu0 0.0
        %1051 = vmatpush2.msra.mxu0 0.0
        %1052 = vmatprep.subr.mxu0 0.0
        %1053 = vmatpush2.msra.mxu0 0.0
        %1054 = vmatprep.subr.mxu0 0.0
        %1055 = vmatpush2.msra.mxu0 0.0
        %1056 = vmatprep.subr.mxu0 0.0
        %1057 = vmatpush2.msra.mxu0 0.0
        %1058 = vmatprep.subr.mxu0 0.0
        %1059 = vmatpush2.msra.mxu0 0.0
        %1060 = vmatprep.subr.mxu0 0.0
        %1061 = vmatpush2.msra.mxu0 0.0
        %1062 = vmatprep.subr.mxu0 0.0
        %1063 = vmatpush2.msra.mxu0 0.0
        %1064 = vmatprep.subr.mxu0 0.0
        %1065 = vmatpush2.msra.mxu0 0.0
        %1066 = vmatprep.subr.mxu0 0.0
        %1067 = vmatpush2.msra.mxu0 0.0
        %1068 = vmatprep.subr.mxu0 0.0
        %1069 = vmatpush2.msra.mxu0 0.0
        %1070 = vmatprep.subr.mxu0 0.0
        %1071 = vmatpush2.msra.mxu0 0.0
        %1072 = vmatprep.subr.mxu0 0.0
        %1073 = vmatpush2.msra.mxu0 0.0
        %1074 = vmatprep.subr.mxu0 0.0
        %1075 = vmatpush2.msra.mxu0 0.0
        %1076 = vmatprep.mubr.f32.mxu0 0.0
        %1077 = vmatmul.mubr.f32.gmra.mxu0 %v1010
        %v1078 = vpop.f32.mrf.mxu0
        %v1079 = vadd.f32 %v1007, %v1078
        %v1080 = vpop.f32.mrf.mxu0
        %v1081 = vadd.f32 %v1007, %v1080
        %1082 = vdwg.mxu0
        %v1083 = vadd.f32 %v256, %v1079
        %v1084 = vadd.f32 %v257, %v1081
        %1085 = vst [vmem:[%s255] sm:$0xff] %v1083
        %1086 = vst [vmem:[%s255 + $0x8] sm:$0xff] %v1084
        %s1087 = sand.u32 %s120, 1
        %s1088 = scalar_lea.sflag [#allocation4], %s1087
        %s1089 = sand.u32 %s120, 1
        %s1090 = smul.addr %s1089, 16
        %s1091 = scalar_lea.vmem [#allocation10], %s1090
        // Predicated region
        $region53: #{tpu_custom_call.1} parent=35 // pred_check
          %p1092 = pneg %p130
        $region54: #{tpu_custom_call.1} parent=35 // pred_check_branch
          %1094 = sbr.rel (%p1092) target = $region56
        $region55: #{tpu_custom_call.1} parent=35 // pred_region
          %s1096 = ssub.s32 256, 256
          %1097 = vsyncadd %s1088, %s1096
          %s1098 = smul.addr %s23, 2
          %s1099 = smul.addr %s1098, 128
          %s1100 = scalar_lea.hbm %s4, %s1099
          %s1102 = sshll.u32 %s1091, 4
          %s1103 = int_to_ptr.vmem [resolvable:$true] %s1102
          %1105 = dma.vmem_to_hbm [thread:$0]  %s1103, 256, %s1100, %s1088
        $region56: #{tpu_custom_call.1} parent=35 // pred_fallthru
          _
      $region36: #{tpu_custom_call.1} parent=5 // pred_fallthru
        _
      %p1106 = scmp.le.s32.totalorder 2, %s18
      // Predicated region
      $region57: #{tpu_custom_call.1} parent=5 // pred_check
        %p1107 = pneg %p1106
      $region58: #{tpu_custom_call.1} parent=5 // pred_check_branch
        %1109 = sbr.rel (%p1107) target = $region60
      $region59: #{tpu_custom_call.1} parent=5 // pred_region
        %s1110 = ssub.s32 %s18, 2
        // Predicated region
        $region61: #{tpu_custom_call.1} parent=59 // pred_check
          %p1111 = pneg %p136
        $region62: #{tpu_custom_call.1} parent=59 // pred_check_branch
          %1113 = sbr.rel (%p1111) target = $region64
        $region63: #{tpu_custom_call.1} parent=59 // pred_region
          %s1114 = sand.u32 %s121, 1
          %s1115 = scalar_lea.sflag [#allocation4], %s1114
          %s1116 = sand.u32 %s121, 1
          %s1117 = smul.addr %s1116, 16
          %s1118 = scalar_lea.vmem [#allocation10], %s1117
          %1119 = dma.done %s1115, 256
        $region64: #{tpu_custom_call.1} parent=59 // pred_fallthru
          _
      $region60: #{tpu_custom_call.1} parent=5 // pred_fallthru
        _
    $region6: #{tpu_custom_call.1} parent=1 // loop_footer
      %s22 = sadd.s32 1, %s18
    $region7: #{tpu_custom_call.1} parent=1 // loop_footer_branch
      %17 = sbr.rel target = $region3
    $region8: #{tpu_custom_call.1} parent=1 // loop_exit
      _
    %1120 = vsyncpa [#allocation3], 1
    %s1121 = scalar_lea.sflag [#allocation3], 1
    %1122 = vsyncpa %s1121, 1
    %1123 = vsyncpa [#allocation6], 1
    %1124 = vsyncpa [#allocation9], 1
    %1125 = vsyncpa [#allocation4], 1
    %s1126 = scalar_lea.sflag [#allocation4], 1
    %1127 = vsyncpa %s1126, 1

</llo_original>
